<compile_context>
chip_gen: v7x
topology: tpu7x:2x2x1
jax: 0.10.0
libtpu: 0.0.40
codegen_flags: <defaults>
</compile_context>

<pallas_src>
import jax
import jax.numpy as jnp
import numpy as np
from jax.experimental import pallas as pl
from jax.experimental.pallas import tpu as pltpu


def _mlp_block(x, w1, b1, w2, b2):
    """One residual MLP block on an (tn, Ck) f32 tile.

    Weights arrive pre-transposed to (C_in, C_out), so both matmuls are plain
    (M, K) @ (K, N) MXU contractions.  Weights may be bf16 (MXU-native); the
    accumulation (preferred_element_type) and all elementwise math stay f32."""
    h = jnp.dot(x.astype(w1.dtype), w1, preferred_element_type=jnp.float32) + b1
    h = jnp.maximum(h, 0.0)                                             # ReLU
    y = jnp.dot(h.astype(w2.dtype), w2, preferred_element_type=jnp.float32) + b2
    return x + y                                                        # residual


def _resident_kernel(x_ref, w1_ref, b1_ref, w2_ref, b2_ref, o_ref):
    """All weights VMEM-resident; fully unrolled in-kernel loop over blocks.

    Grid is (num_row_tiles,) only -> no per-block grid-step overhead; the small
    per-block matmuls can be overlapped by the LLO scheduler."""
    num_blocks = w1_ref.shape[0]
    acc = x_ref[...].astype(jnp.float32)
    for k in range(num_blocks):       # static & small -> fully unrolled
        acc = _mlp_block(acc, w1_ref[k], b1_ref[k], w2_ref[k], b2_ref[k])
    o_ref[...] = acc.astype(o_ref.dtype)


def _streaming_kernel(x_ref, w1_ref, b1_ref, w2_ref, b2_ref, o_ref):
    """Per-block streamed weights; the activation row tile lives in o_ref.

    o_ref's block index is constant along the block axis k, so it stays
    VMEM-resident across the whole sequential sweep and is written back to HBM
    only when the row tile changes."""
    k = pl.program_id(1)

    @pl.when(k == 0)
    def _():
        o_ref[...] = x_ref[...]

    x = o_ref[...].astype(jnp.float32)
    out = _mlp_block(x, w1_ref[0], b1_ref[0], w2_ref[0], b2_ref[0])
    o_ref[...] = out.astype(o_ref.dtype)


def feature_mixer(x, w1, b1, w2, b2, *, weights_resident=None,
                  use_bf16_weights=False):
    """x: (B, C, T).  w1, w2: (num_blocks, C, C) in PyTorch Linear layout
    (y = x @ W^T + b).  b1, b2: (num_blocks, C).

    weights_resident: None = auto (resident path if padded weights fit in half
    the VMEM budget), True/False to force a path.
    use_bf16_weights: run the two matmuls with bf16 weights/LHS and f32
    accumulation (faster on the MXU; slightly looser numerics)."""
    B, C, T = x.shape
    nb = int(w1.shape[0])
    N = B * T
    itemsize = jnp.dtype(x.dtype).itemsize

    # torch .view(B*T, C) on contiguous (B, C, T) == row-major reshape.
    x2d = jnp.reshape(x, (N, C))

    # One-time wrapper transpose to (C_in, C_out): kernel does plain (M,K)@(K,N).
    w1t = jnp.swapaxes(w1, -1, -2)
    w2t = jnp.swapaxes(w2, -1, -2)
    b1k, b2k = b1, b2

    # ---- Lane packing for small C (exact: block-diagonal weights) ----------
    P = 1
    if C < 128 and (128 % C) == 0:
        P = 128 // C
    if P > 1:
        Np = ((N + P - 1) // P) * P
        if Np != N:
            x2d = jnp.pad(x2d, ((0, Np - N), (0, 0)))   # pad rows sliced off below
        x2d = jnp.reshape(x2d, (Np // P, P * C))        # P consecutive rows per row
        eye = jnp.eye(P, dtype=w1t.dtype)
        # block_diag(W, ..., W) == kron(I_P, W); built once in the wrapper.
        w1t = jnp.einsum('pq,kij->kpiqj', eye, w1t).reshape(nb, P * C, P * C)
        w2t = jnp.einsum('pq,kij->kpiqj', eye, w2t).reshape(nb, P * C, P * C)
        b1k = jnp.tile(b1, (1, P))
        b2k = jnp.tile(b2, (1, P))
    else:
        Np = N

    Nk, Ck = x2d.shape            # kernel-facing rows / features

    if use_bf16_weights:
        w1t = w1t.astype(jnp.bfloat16)
        w2t = w2t.astype(jnp.bfloat16)
    w_itemsize = jnp.dtype(w1t.dtype).itemsize

    # ---- Generation-aware VMEM budgeting ------------------------------------
    try:
        vmem_cap = int(pltpu.get_tpu_info().vmem_capacity_bytes)
    except Exception:
        vmem_cap = 64 * 1024 * 1024            # conservative (v7x-sized) fallback
    # v5e/v6e (128 MiB): 64 MiB scoped limit; v7x (64 MiB): 48 MiB.
    vmem_limit = max(32 * 1024 * 1024, min(64 * 1024 * 1024, (vmem_cap * 3) // 4))
    vmem_budget = vmem_limit - 8 * 1024 * 1024  # headroom for internal scratch

    def _rup(v, m):
        return ((int(v) + m - 1) // m) * m

    def _padded2d(r, c, isz):                   # VMEM sublane/lane padded bytes
        return _rup(max(int(r), 1), 8) * _rup(max(int(c), 1), 128) * isz

    w_bytes_resident = (nb * 2 * _padded2d(Ck, Ck, w_itemsize)
                        + 2 * _padded2d(nb, Ck, itemsize))
    w_bytes_streamed = 2 * (2 * _padded2d(Ck, Ck, w_itemsize)
                            + 2 * _padded2d(1, Ck, itemsize))

    if weights_resident is None:
        weights_resident = w_bytes_resident <= vmem_budget // 2

    # ---- Row-tile choice -----------------------------------------------------
    # Per row: double-buffered x + out tiles (4x) plus live temporaries
    # (acc, h, bf16 casts) -> budget ~8 x lane-padded Ck x itemsize per row.
    per_row_bytes = 8 * _rup(Ck, 128) * itemsize
    wb = w_bytes_resident if weights_resident else w_bytes_streamed
    tn_cap = max(8, (vmem_budget - wb) // per_row_bytes)
    ROW_TILE_MAX = 16384          # big tiles amortize the ~0.35us grid-step cost

    if Nk <= tn_cap:
        if Nk >= 512:
            # Keep >= 2 row tiles so v7x's second TensorCore gets work.
            tn = _rup(-(-Nk // 2), 8)
        else:
            tn = Nk               # full extent is always a legal block dim
    else:
        tn = max(8, (min(tn_cap, ROW_TILE_MAX) // 8) * 8)
    num_row_tiles = pl.cdiv(Nk, tn)

    if weights_resident:
        out2d = pl.pallas_call(
            _resident_kernel,
            out_shape=jax.ShapeDtypeStruct((Nk, Ck), x.dtype),
            grid_spec=pltpu.PrefetchScalarGridSpec(
                num_scalar_prefetch=0,
                grid=(num_row_tiles,),
                in_specs=[
                    pl.BlockSpec((tn, Ck), lambda i: (i, 0)),           # x row tile
                    pl.BlockSpec((nb, Ck, Ck), lambda i: (0, 0, 0)),    # all W1
                    pl.BlockSpec((nb, Ck), lambda i: (0, 0)),           # all b1
                    pl.BlockSpec((nb, Ck, Ck), lambda i: (0, 0, 0)),    # all W2
                    pl.BlockSpec((nb, Ck), lambda i: (0, 0)),           # all b2
                ],
                out_specs=pl.BlockSpec((tn, Ck), lambda i: (i, 0)),
            ),
            compiler_params=pltpu.CompilerParams(
                dimension_semantics=("parallel",),    # rows independent -> megacore
                vmem_limit_bytes=vmem_limit,
            ),
        )(x2d, w1t, b1k, w2t, b2k)
    else:
        out2d = pl.pallas_call(
            _streaming_kernel,
            out_shape=jax.ShapeDtypeStruct((Nk, Ck), x.dtype),
            grid_spec=pltpu.PrefetchScalarGridSpec(
                num_scalar_prefetch=0,
                grid=(num_row_tiles, nb),             # block axis innermost
                in_specs=[
                    pl.BlockSpec((tn, Ck), lambda i, k: (i, 0)),        # x row tile
                    pl.BlockSpec((1, Ck, Ck), lambda i, k: (k, 0, 0)),  # W1 of block k
                    pl.BlockSpec((1, Ck), lambda i, k: (k, 0)),         # b1 of block k
                    pl.BlockSpec((1, Ck, Ck), lambda i, k: (k, 0, 0)),  # W2 of block k
                    pl.BlockSpec((1, Ck), lambda i, k: (k, 0)),         # b2 of block k
                ],
                out_specs=pl.BlockSpec((tn, Ck), lambda i, k: (i, 0)),
            ),
            compiler_params=pltpu.CompilerParams(
                dimension_semantics=("parallel", "arbitrary"),
                vmem_limit_bytes=vmem_limit,
            ),
        )(x2d, w1t, b1k, w2t, b2k)

    if P > 1:
        out2d = jnp.reshape(out2d, (Np, C))[:N]
    return jnp.reshape(out2d, (B, C, T))


def feature_mixer_ref(x, w1, b1, w2, b2):
    """Pure-JAX reference matching the PyTorch forward."""
    B, C, T = x.shape
    h = jnp.reshape(x, (B * T, C))
    for k in range(w1.shape[0]):
        r = jnp.maximum(h @ w1[k].T + b1[k], 0.0) @ w2[k].T + b2[k]
        h = h + r
    return jnp.reshape(h, (B, C, T))


def _make_inputs(key, B, C, T, num_blocks):
    kx, kw1, kb1, kw2, kb2 = jax.random.split(key, 5)
    scale = 1.0 / np.sqrt(C)
    x = jax.random.normal(kx, (B, C, T), dtype=jnp.float32)
    w1 = jax.random.uniform(kw1, (num_blocks, C, C), jnp.float32, -scale, scale)
    b1 = jax.random.uniform(kb1, (num_blocks, C), jnp.float32, -scale, scale)
    w2 = jax.random.uniform(kw2, (num_blocks, C, C), jnp.float32, -scale, scale)
    b2 = jax.random.uniform(kb2, (num_blocks, C), jnp.float32, -scale, scale)
    return x, w1, b1, w2, b2


if __name__ == "__main__":
    key = jax.random.PRNGKey(0)
    k1, k2, k3 = jax.random.split(key, 3)

    # 1) Small config consistent with the module (resident + lane-packed path).
    B, C, T, nb = 2, 32, 16, 3
    x, w1, b1, w2, b2 = _make_inputs(k1, B, C, T, nb)
    out = jax.block_until_ready(feature_mixer(x, w1, b1, w2, b2))
    ref = feature_mixer_ref(x, w1, b1, w2, b2)
    assert out.shape == (B, C, T)
    np.testing.assert_allclose(np.asarray(out), np.asarray(ref),
                               rtol=1e-4, atol=1e-4)

    # 2) Larger N, same small C: exercises lane packing + >=2 row tiles.
    B2, C2, T2, nb2 = 4, 32, 512, 3
    x2, w1b, b1b, w2b, b2b = _make_inputs(k2, B2, C2, T2, nb2)
    out2 = jax.block_until_ready(feature_mixer(x2, w1b, b1b, w2b, b2b))
    ref2 = feature_mixer_ref(x2, w1b, b1b, w2b, b2b)
    assert out2.shape == (B2, C2, T2)
    np.testing.assert_allclose(np.asarray(out2), np.asarray(ref2),
                               rtol=1e-4, atol=1e-4)

    # 3) C=128 config, forced onto the weight-streaming path (f32).
    B3, C3, T3, nb3 = 2, 128, 32, 2
    x3, w1c, b1c, w2c, b2c = _make_inputs(k3, B3, C3, T3, nb3)
    out3 = jax.block_until_ready(
        feature_mixer(x3, w1c, b1c, w2c, b2c, weights_resident=False))
    ref3 = feature_mixer_ref(x3, w1c, b1c, w2c, b2c)
    assert out3.shape == (B3, C3, T3)
    np.testing.assert_allclose(np.asarray(out3), np.asarray(ref3),
                               rtol=1e-3, atol=1e-3)

    # 4) Same C=128 config with bf16 MXU operands (relaxed tolerance).
    out4 = jax.block_until_ready(
        feature_mixer(x3, w1c, b1c, w2c, b2c, use_bf16_weights=True))
    np.testing.assert_allclose(np.asarray(out4), np.asarray(ref3),
                               rtol=2e-2, atol=3e-2)

    print("KERNEL_OK")
</pallas_src>

<mosaic_0001>
module attributes {stable_mosaic.version = 11 : i64} {
  func.func @_resident_kernel(%arg0: i32, %arg1: memref<8x128xf32, #tpu.memory_space<vmem>>, %arg2: memref<3x128x128xf32, #tpu.memory_space<vmem>>, %arg3: memref<3x128xf32, #tpu.memory_space<vmem>>, %arg4: memref<3x128x128xf32, #tpu.memory_space<vmem>>, %arg5: memref<3x128xf32, #tpu.memory_space<vmem>>, %arg6: memref<8x128xf32, #tpu.memory_space<vmem>>) attributes {dimension_semantics = [#tpu.dimension_semantics<parallel>], iteration_bounds = array<i64: 1>, scalar_prefetch = 0 : i64, scratch_operands = 0 : i64, tpu.core_type = #tpu.core_type<tc>, window_params = [{transform_indices = @transform_0, window_bounds = array<i64: 8, 128>}, {pipeline_mode = #tpu.pipeline_mode<synchronous>, transform_indices = @transform_1, window_bounds = array<i64: 3, 128, 128>}, {pipeline_mode = #tpu.pipeline_mode<synchronous>, transform_indices = @transform_2, window_bounds = array<i64: 3, 128>}, {pipeline_mode = #tpu.pipeline_mode<synchronous>, transform_indices = @transform_3, window_bounds = array<i64: 3, 128, 128>}, {pipeline_mode = #tpu.pipeline_mode<synchronous>, transform_indices = @transform_4, window_bounds = array<i64: 3, 128>}, {transform_indices = @transform_5, window_bounds = array<i64: 8, 128>}]} {
    %c0 = arith.constant 0 : index
    %c0_0 = arith.constant 0 : index
    %0 = vector.load %arg1[%c0, %c0_0] : memref<8x128xf32, #tpu.memory_space<vmem>>, vector<8x128xf32>
    %c0_1 = arith.constant 0 : index
    %c0_2 = arith.constant 0 : index
    %c0_3 = arith.constant 0 : index
    %1 = vector.load %arg2[%c0_1, %c0_2, %c0_3] : memref<3x128x128xf32, #tpu.memory_space<vmem>>, vector<1x128x128xf32>
    %2 = vector.shape_cast %1 : vector<1x128x128xf32> to vector<128x128xf32>
    %c0_4 = arith.constant 0 : index
    %c0_5 = arith.constant 0 : index
    %3 = vector.load %arg3[%c0_4, %c0_5] : memref<3x128xf32, #tpu.memory_space<vmem>>, vector<1x128xf32>
    %4 = vector.shape_cast %3 : vector<1x128xf32> to vector<128xf32>
    %c0_6 = arith.constant 0 : index
    %c0_7 = arith.constant 0 : index
    %c0_8 = arith.constant 0 : index
    %5 = vector.load %arg4[%c0_6, %c0_7, %c0_8] : memref<3x128x128xf32, #tpu.memory_space<vmem>>, vector<1x128x128xf32>
    %6 = vector.shape_cast %5 : vector<1x128x128xf32> to vector<128x128xf32>
    %c0_9 = arith.constant 0 : index
    %c0_10 = arith.constant 0 : index
    %7 = vector.load %arg5[%c0_9, %c0_10] : memref<3x128xf32, #tpu.memory_space<vmem>>, vector<1x128xf32>
    %8 = vector.shape_cast %7 : vector<1x128xf32> to vector<128xf32>
    %cst = arith.constant dense<0.000000e+00> : vector<8x128xf32>
    %9 = tpu.matmul %0, %2, %cst {dimension_numbers = #tpu.dot_dimension_numbers<[1], [0], [0], [1], [0, 0, 1, 1], [], []>} : vector<8x128xf32>, vector<128x128xf32>, vector<8x128xf32> -> vector<8x128xf32>
    %10 = vector.shape_cast %4 : vector<128xf32> to vector<1x128xf32>
    %11 = vector.broadcast %10 : vector<1x128xf32> to vector<8x128xf32>
    %12 = arith.addf %9, %11 : vector<8x128xf32>
    %cst_11 = arith.constant 0.000000e+00 : f32
    %13 = vector.broadcast %cst_11 : f32 to vector<8x128xf32>
    %14 = arith.maximumf %12, %13 : vector<8x128xf32>
    %cst_12 = arith.constant dense<0.000000e+00> : vector<8x128xf32>
    %15 = tpu.matmul %14, %6, %cst_12 {dimension_numbers = #tpu.dot_dimension_numbers<[1], [0], [0], [1], [0, 0, 1, 1], [], []>} : vector<8x128xf32>, vector<128x128xf32>, vector<8x128xf32> -> vector<8x128xf32>
    %16 = vector.shape_cast %8 : vector<128xf32> to vector<1x128xf32>
    %17 = vector.broadcast %16 : vector<1x128xf32> to vector<8x128xf32>
    %18 = arith.addf %15, %17 : vector<8x128xf32>
    %19 = arith.addf %0, %18 : vector<8x128xf32>
    %c1 = arith.constant 1 : index
    %c0_13 = arith.constant 0 : index
    %c0_14 = arith.constant 0 : index
    %20 = vector.load %arg2[%c1, %c0_13, %c0_14] : memref<3x128x128xf32, #tpu.memory_space<vmem>>, vector<1x128x128xf32>
    %21 = vector.shape_cast %20 : vector<1x128x128xf32> to vector<128x128xf32>
    %c1_15 = arith.constant 1 : index
    %c0_16 = arith.constant 0 : index
    %22 = vector.load %arg3[%c1_15, %c0_16] : memref<3x128xf32, #tpu.memory_space<vmem>>, vector<1x128xf32>
    %23 = vector.shape_cast %22 : vector<1x128xf32> to vector<128xf32>
    %c1_17 = arith.constant 1 : index
    %c0_18 = arith.constant 0 : index
    %c0_19 = arith.constant 0 : index
    %24 = vector.load %arg4[%c1_17, %c0_18, %c0_19] : memref<3x128x128xf32, #tpu.memory_space<vmem>>, vector<1x128x128xf32>
    %25 = vector.shape_cast %24 : vector<1x128x128xf32> to vector<128x128xf32>
    %c1_20 = arith.constant 1 : index
    %c0_21 = arith.constant 0 : index
    %26 = vector.load %arg5[%c1_20, %c0_21] : memref<3x128xf32, #tpu.memory_space<vmem>>, vector<1x128xf32>
    %27 = vector.shape_cast %26 : vector<1x128xf32> to vector<128xf32>
    %cst_22 = arith.constant dense<0.000000e+00> : vector<8x128xf32>
    %28 = tpu.matmul %19, %21, %cst_22 {dimension_numbers = #tpu.dot_dimension_numbers<[1], [0], [0], [1], [0, 0, 1, 1], [], []>} : vector<8x128xf32>, vector<128x128xf32>, vector<8x128xf32> -> vector<8x128xf32>
    %29 = vector.shape_cast %23 : vector<128xf32> to vector<1x128xf32>
    %30 = vector.broadcast %29 : vector<1x128xf32> to vector<8x128xf32>
    %31 = arith.addf %28, %30 : vector<8x128xf32>
    %cst_23 = arith.constant 0.000000e+00 : f32
    %32 = vector.broadcast %cst_23 : f32 to vector<8x128xf32>
    %33 = arith.maximumf %31, %32 : vector<8x128xf32>
    %cst_24 = arith.constant dense<0.000000e+00> : vector<8x128xf32>
    %34 = tpu.matmul %33, %25, %cst_24 {dimension_numbers = #tpu.dot_dimension_numbers<[1], [0], [0], [1], [0, 0, 1, 1], [], []>} : vector<8x128xf32>, vector<128x128xf32>, vector<8x128xf32> -> vector<8x128xf32>
    %35 = vector.shape_cast %27 : vector<128xf32> to vector<1x128xf32>
    %36 = vector.broadcast %35 : vector<1x128xf32> to vector<8x128xf32>
    %37 = arith.addf %34, %36 : vector<8x128xf32>
    %38 = arith.addf %19, %37 : vector<8x128xf32>
    %c2 = arith.constant 2 : index
    %c0_25 = arith.constant 0 : index
    %c0_26 = arith.constant 0 : index
    %39 = vector.load %arg2[%c2, %c0_25, %c0_26] : memref<3x128x128xf32, #tpu.memory_space<vmem>>, vector<1x128x128xf32>
    %40 = vector.shape_cast %39 : vector<1x128x128xf32> to vector<128x128xf32>
    %c2_27 = arith.constant 2 : index
    %c0_28 = arith.constant 0 : index
    %41 = vector.load %arg3[%c2_27, %c0_28] : memref<3x128xf32, #tpu.memory_space<vmem>>, vector<1x128xf32>
    %42 = vector.shape_cast %41 : vector<1x128xf32> to vector<128xf32>
    %c2_29 = arith.constant 2 : index
    %c0_30 = arith.constant 0 : index
    %c0_31 = arith.constant 0 : index
    %43 = vector.load %arg4[%c2_29, %c0_30, %c0_31] : memref<3x128x128xf32, #tpu.memory_space<vmem>>, vector<1x128x128xf32>
    %44 = vector.shape_cast %43 : vector<1x128x128xf32> to vector<128x128xf32>
    %c2_32 = arith.constant 2 : index
    %c0_33 = arith.constant 0 : index
    %45 = vector.load %arg5[%c2_32, %c0_33] : memref<3x128xf32, #tpu.memory_space<vmem>>, vector<1x128xf32>
    %46 = vector.shape_cast %45 : vector<1x128xf32> to vector<128xf32>
    %cst_34 = arith.constant dense<0.000000e+00> : vector<8x128xf32>
    %47 = tpu.matmul %38, %40, %cst_34 {dimension_numbers = #tpu.dot_dimension_numbers<[1], [0], [0], [1], [0, 0, 1, 1], [], []>} : vector<8x128xf32>, vector<128x128xf32>, vector<8x128xf32> -> vector<8x128xf32>
    %48 = vector.shape_cast %42 : vector<128xf32> to vector<1x128xf32>
    %49 = vector.broadcast %48 : vector<1x128xf32> to vector<8x128xf32>
    %50 = arith.addf %47, %49 : vector<8x128xf32>
    %cst_35 = arith.constant 0.000000e+00 : f32
    %51 = vector.broadcast %cst_35 : f32 to vector<8x128xf32>
    %52 = arith.maximumf %50, %51 : vector<8x128xf32>
    %cst_36 = arith.constant dense<0.000000e+00> : vector<8x128xf32>
    %53 = tpu.matmul %52, %44, %cst_36 {dimension_numbers = #tpu.dot_dimension_numbers<[1], [0], [0], [1], [0, 0, 1, 1], [], []>} : vector<8x128xf32>, vector<128x128xf32>, vector<8x128xf32> -> vector<8x128xf32>
    %54 = vector.shape_cast %46 : vector<128xf32> to vector<1x128xf32>
    %55 = vector.broadcast %54 : vector<1x128xf32> to vector<8x128xf32>
    %56 = arith.addf %53, %55 : vector<8x128xf32>
    %57 = arith.addf %38, %56 : vector<8x128xf32>
    %c0_37 = arith.constant 0 : index
    %c0_38 = arith.constant 0 : index
    %58 = vector.load %arg6[%c0_37, %c0_38] : memref<8x128xf32, #tpu.memory_space<vmem>>, vector<8x128xf32>
    tpu.vector_store %arg6[%c0_37, %c0_38], %57 {strides = array<i32>} : memref<8x128xf32, #tpu.memory_space<vmem>>, vector<8x128xf32>,
    return
  }
  func.func @transform_0(%arg0: i32) -> (i32, i32) {
    %c0_i32 = arith.constant 0 : i32
    %c0_i32_0 = arith.constant 0 : i32
    return %arg0, %c0_i32 : i32, i32
  }
  func.func @transform_1(%arg0: i32) -> (i32, i32, i32) {
    %c0_i32 = arith.constant 0 : i32
    %c0_i32_0 = arith.constant 0 : i32
    %c0_i32_1 = arith.constant 0 : i32
    %c0_i32_2 = arith.constant 0 : i32
    return %c0_i32, %c0_i32_0, %c0_i32_1 : i32, i32, i32
  }
  func.func @transform_2(%arg0: i32) -> (i32, i32) {
    %c0_i32 = arith.constant 0 : i32
    %c0_i32_0 = arith.constant 0 : i32
    %c0_i32_1 = arith.constant 0 : i32
    return %c0_i32, %c0_i32_0 : i32, i32
  }
  func.func @transform_3(%arg0: i32) -> (i32, i32, i32) {
    %c0_i32 = arith.constant 0 : i32
    %c0_i32_0 = arith.constant 0 : i32
    %c0_i32_1 = arith.constant 0 : i32
    %c0_i32_2 = arith.constant 0 : i32
    return %c0_i32, %c0_i32_0, %c0_i32_1 : i32, i32, i32
  }
  func.func @transform_4(%arg0: i32) -> (i32, i32) {
    %c0_i32 = arith.constant 0 : i32
    %c0_i32_0 = arith.constant 0 : i32
    %c0_i32_1 = arith.constant 0 : i32
    return %c0_i32, %c0_i32_0 : i32, i32
  }
  func.func @transform_5(%arg0: i32) -> (i32, i32) {
    %c0_i32 = arith.constant 0 : i32
    %c0_i32_0 = arith.constant 0 : i32
    return %arg0, %c0_i32 : i32, i32
  }
}

</mosaic_0001>

<llo_original>
// kernel: tpu_custom_call.1
$region0: #{tpu_custom_call.1}
  #allocation0 [shape = 'u32[]', space=smem, size = 0x4, offset = 0x4, fixed_abs, tag = 'smem constant byte address 0x4 - core index']
  #allocation1 [shape = 'u32[144,128]{1,0:T(1,128)}', space=vmem, size = 0x12000, scoped, tag = 'internal scratch']
  %s0 = inlined_call_operand.hbm [shape: f32[8,128], index: 0, kind: input, shape index: {}]
  %s1 = inlined_call_operand.hbm [shape: f32[3,128,128], index: 1, kind: input, shape index: {}]
  %s2 = inlined_call_operand.vmem [shape: f32[3,128], index: 2, kind: input, shape index: {}]
  %s3 = inlined_call_operand.hbm [shape: f32[3,128,128], index: 3, kind: input, shape index: {}]
  %s4 = inlined_call_operand.vmem [shape: f32[3,128], index: 4, kind: input, shape index: {}]
  %s5 = inlined_call_operand.hbm [shape: f32[8,128], index: 5, kind: output, shape index: {}]
  %s6 = sld [smem:[#allocation0]]
  $region42: #{tpu_custom_call.1} parent=0
    _
  %s8 = ssub.s32 1, %s6
  %s9 = scalar_select 0, %s8, %s6
  $region1: #{tpu_custom_call.1} parent=0
    #allocation2 [shape = 'u8[4096]{0}', space=vmem, size = 0x1000, scoped, tag = 'input window, operand 0, single buffered']
    #allocation3 [shape = 's32[1]{0}', space=sflag, size = 0x4, scoped, tag = 'scoped memory for tpu_custom_call.1']
    #allocation4 [shape = 's32[1]{0}', space=sflag, size = 0x4, scoped, tag = 'scoped memory for tpu_custom_call.1']
    #allocation5 [shape = 'u8[196608]{0}', space=vmem, size = 0x30000, scoped, tag = 'input window, operand 1, single buffered']
    #allocation6 [shape = 's32[1]{0}', space=sflag, size = 0x4, scoped, tag = 'scoped memory for tpu_custom_call.1']
    #allocation7 [shape = 'u8[196608]{0}', space=vmem, size = 0x30000, scoped, tag = 'input window, operand 3, single buffered']
    #allocation8 [shape = 'u8[4096]{0}', space=vmem, size = 0x1000, scoped, tag = 'output window, operand 0, single buffered']
    %10 = vsyncpa [#allocation3], 0
    %11 = vsyncpa [#allocation6], 0
    %12 = vsyncpa [#allocation4], 0
    // Predicated region
    $region2: #{tpu_custom_call.1} parent=1 // pred_check
      _
    $region3: #{tpu_custom_call.1} parent=1 // pred_check_branch
      %14 = sbr.rel (0) target = $region5
    $region4: #{tpu_custom_call.1} parent=1 // pred_region
      %s16 = ssub.s32 128, 128
      %17 = vsyncadd [#allocation3], %s16
      %s19 = sshll.u32 [#allocation2], 4
      %s20 = int_to_ptr.vmem [resolvable:$true] %s19
      %22 = dma.hbm_to_vmem [thread:$0]  %s0, 128, %s20, [#allocation3]
    $region5: #{tpu_custom_call.1} parent=1 // pred_fallthru
      _
    // Predicated region
    $region6: #{tpu_custom_call.1} parent=1 // pred_check
      _
    $region7: #{tpu_custom_call.1} parent=1 // pred_check_branch
      %24 = sbr.rel (0) target = $region9
    $region8: #{tpu_custom_call.1} parent=1 // pred_region
      %s26 = ssub.s32 6144, 6144
      %27 = vsyncadd [#allocation6], %s26
      %s28 = sshll.u32 [#allocation5], 4
      %s29 = int_to_ptr.vmem [resolvable:$true] %s28
      %34 = dma.hbm_to_vmem [thread:$0]  %s1, 6144, %s29, [#allocation6], 128, 128, 8
    $region9: #{tpu_custom_call.1} parent=1 // pred_fallthru
      _
    // Predicated region
    $region10: #{tpu_custom_call.1} parent=1 // pred_check
      _
    $region11: #{tpu_custom_call.1} parent=1 // pred_check_branch
      %36 = sbr.rel (0) target = $region13
    $region12: #{tpu_custom_call.1} parent=1 // pred_region
      _
    $region13: #{tpu_custom_call.1} parent=1 // pred_fallthru
      _
    // Predicated region
    $region14: #{tpu_custom_call.1} parent=1 // pred_check
      _
    $region15: #{tpu_custom_call.1} parent=1 // pred_check_branch
      %38 = sbr.rel (0) target = $region17
    $region16: #{tpu_custom_call.1} parent=1 // pred_region
      %s40 = ssub.s32 6144, 6144
      %41 = vsyncadd [#allocation6], %s40
      %s42 = sshll.u32 [#allocation7], 4
      %s43 = int_to_ptr.vmem [resolvable:$true] %s42
      %48 = dma.hbm_to_vmem [thread:$0]  %s3, 6144, %s43, [#allocation6], 128, 128, 8
    $region17: #{tpu_custom_call.1} parent=1 // pred_fallthru
      _
    // Predicated region
    $region18: #{tpu_custom_call.1} parent=1 // pred_check
      _
    $region19: #{tpu_custom_call.1} parent=1 // pred_check_branch
      %50 = sbr.rel (0) target = $region21
    $region20: #{tpu_custom_call.1} parent=1 // pred_region
      _
    $region21: #{tpu_custom_call.1} parent=1 // pred_fallthru
      _
    // Predicated region
    $region22: #{tpu_custom_call.1} parent=1 // pred_check
      _
    $region23: #{tpu_custom_call.1} parent=1 // pred_check_branch
      %52 = sbr.rel (0) target = $region25
    $region24: #{tpu_custom_call.1} parent=1 // pred_region
      %53 = dma.done [#allocation3], 128
    $region25: #{tpu_custom_call.1} parent=1 // pred_fallthru
      _
    // Predicated region
    $region26: #{tpu_custom_call.1} parent=1 // pred_check
      _
    $region27: #{tpu_custom_call.1} parent=1 // pred_check_branch
      %55 = sbr.rel (0) target = $region29
    $region28: #{tpu_custom_call.1} parent=1 // pred_region
      %56 = dma.done [#allocation6], 6144
    $region29: #{tpu_custom_call.1} parent=1 // pred_fallthru
      _
    // Predicated region
    $region30: #{tpu_custom_call.1} parent=1 // pred_check
      _
    $region31: #{tpu_custom_call.1} parent=1 // pred_check_branch
      %58 = sbr.rel (0) target = $region33
    $region32: #{tpu_custom_call.1} parent=1 // pred_region
      %59 = dma.done [#allocation6], 6144
    $region33: #{tpu_custom_call.1} parent=1 // pred_fallthru
      _
    %v60 = vld [vmem:[#allocation2] sm:$0xff]
    %v61 = vld [vmem:[#allocation5] sm:$0xff]
    %v62 = vld [vmem:[#allocation5 + $0x8] sm:$0xff]
    %v63 = vld [vmem:[#allocation5 + $0x10] sm:$0xff]
    %v64 = vld [vmem:[#allocation5 + $0x18] sm:$0xff]
    %v65 = vld [vmem:[#allocation5 + $0x20] sm:$0xff]
    %v66 = vld [vmem:[#allocation5 + $0x28] sm:$0xff]
    %v67 = vld [vmem:[#allocation5 + $0x30] sm:$0xff]
    %v68 = vld [vmem:[#allocation5 + $0x38] sm:$0xff]
    %v69 = vld [vmem:[#allocation5 + $0x40] sm:$0xff]
    %v70 = vld [vmem:[#allocation5 + $0x48] sm:$0xff]
    %v71 = vld [vmem:[#allocation5 + $0x50] sm:$0xff]
    %v72 = vld [vmem:[#allocation5 + $0x58] sm:$0xff]
    %v73 = vld [vmem:[#allocation5 + $0x60] sm:$0xff]
    %v74 = vld [vmem:[#allocation5 + $0x68] sm:$0xff]
    %v75 = vld [vmem:[#allocation5 + $0x70] sm:$0xff]
    %v76 = vld [vmem:[#allocation5 + $0x78] sm:$0xff]
    %v77 = vld [vmem:[%s2] sm:$0x1]
    %v78 = vld [vmem:[#allocation7] sm:$0xff]
    %v79 = vld [vmem:[#allocation7 + $0x8] sm:$0xff]
    %v80 = vld [vmem:[#allocation7 + $0x10] sm:$0xff]
    %v81 = vld [vmem:[#allocation7 + $0x18] sm:$0xff]
    %v82 = vld [vmem:[#allocation7 + $0x20] sm:$0xff]
    %v83 = vld [vmem:[#allocation7 + $0x28] sm:$0xff]
    %v84 = vld [vmem:[#allocation7 + $0x30] sm:$0xff]
    %v85 = vld [vmem:[#allocation7 + $0x38] sm:$0xff]
    %v86 = vld [vmem:[#allocation7 + $0x40] sm:$0xff]
    %v87 = vld [vmem:[#allocation7 + $0x48] sm:$0xff]
    %v88 = vld [vmem:[#allocation7 + $0x50] sm:$0xff]
    %v89 = vld [vmem:[#allocation7 + $0x58] sm:$0xff]
    %v90 = vld [vmem:[#allocation7 + $0x60] sm:$0xff]
    %v91 = vld [vmem:[#allocation7 + $0x68] sm:$0xff]
    %v92 = vld [vmem:[#allocation7 + $0x70] sm:$0xff]
    %v93 = vld [vmem:[#allocation7 + $0x78] sm:$0xff]
    %v94 = vld [vmem:[%s4] sm:$0x1]
    %v95 = vlaneseq
    %v96 = vshrl.u32 %v95, 7
    %v97 = vsub.s32 0, %v96
    %v98 = vrot.slane %v77, %v97
    %99 = vmatprep.subr.mxu0 0.0
    %100 = vmatpush1.msra.mxu0 %v61
    %101 = vmatprep.subr.mxu0 0.0
    %102 = vmatpush1.msra.mxu0 %v62
    %103 = vmatprep.subr.mxu0 0.0
    %104 = vmatpush1.msra.mxu0 %v63
    %105 = vmatprep.subr.mxu0 0.0
    %106 = vmatpush1.msra.mxu0 %v64
    %107 = vmatprep.subr.mxu0 0.0
    %108 = vmatpush1.msra.mxu0 %v65
    %109 = vmatprep.subr.mxu0 0.0
    %110 = vmatpush1.msra.mxu0 %v66
    %111 = vmatprep.subr.mxu0 0.0
    %112 = vmatpush1.msra.mxu0 %v67
    %113 = vmatprep.subr.mxu0 0.0
    %114 = vmatpush1.msra.mxu0 %v68
    %115 = vmatprep.subr.mxu0 0.0
    %116 = vmatpush1.msra.mxu0 %v69
    %117 = vmatprep.subr.mxu0 0.0
    %118 = vmatpush1.msra.mxu0 %v70
    %119 = vmatprep.subr.mxu0 0.0
    %120 = vmatpush1.msra.mxu0 %v71
    %121 = vmatprep.subr.mxu0 0.0
    %122 = vmatpush1.msra.mxu0 %v72
    %123 = vmatprep.subr.mxu0 0.0
    %124 = vmatpush1.msra.mxu0 %v73
    %125 = vmatprep.subr.mxu0 0.0
    %126 = vmatpush1.msra.mxu0 %v74
    %127 = vmatprep.subr.mxu0 0.0
    %128 = vmatpush1.msra.mxu0 %v75
    %129 = vmatprep.subr.mxu0 0.0
    %130 = vmatpush1.msra.mxu0 %v76
    %131 = vmatprep.subr.mxu0 0.0
    %132 = vmatpush1.msra.mxu0 0.0
    %133 = vmatprep.subr.mxu0 0.0
    %134 = vmatpush1.msra.mxu0 0.0
    %135 = vmatprep.subr.mxu0 0.0
    %136 = vmatpush1.msra.mxu0 0.0
    %137 = vmatprep.subr.mxu0 0.0
    %138 = vmatpush1.msra.mxu0 0.0
    %139 = vmatprep.subr.mxu0 0.0
    %140 = vmatpush1.msra.mxu0 0.0
    %141 = vmatprep.subr.mxu0 0.0
    %142 = vmatpush1.msra.mxu0 0.0
    %143 = vmatprep.subr.mxu0 0.0
    %144 = vmatpush1.msra.mxu0 0.0
    %145 = vmatprep.subr.mxu0 0.0
    %146 = vmatpush1.msra.mxu0 0.0
    %147 = vmatprep.subr.mxu0 0.0
    %148 = vmatpush1.msra.mxu0 0.0
    %149 = vmatprep.subr.mxu0 0.0
    %150 = vmatpush1.msra.mxu0 0.0
    %151 = vmatprep.subr.mxu0 0.0
    %152 = vmatpush1.msra.mxu0 0.0
    %153 = vmatprep.subr.mxu0 0.0
    %154 = vmatpush1.msra.mxu0 0.0
    %155 = vmatprep.subr.mxu0 0.0
    %156 = vmatpush1.msra.mxu0 0.0
    %157 = vmatprep.subr.mxu0 0.0
    %158 = vmatpush1.msra.mxu0 0.0
    %159 = vmatprep.subr.mxu0 0.0
    %160 = vmatpush1.msra.mxu0 0.0
    %161 = vmatprep.subr.mxu0 0.0
    %162 = vmatpush1.msra.mxu0 0.0
    %163 = vmatprep.mubr.f32.mxu0 0.0
    %164 = vmatmul.mubr.f32.gmra.mrb[0].mxu0 %v60
    %v165 = vpop.f32.mrb[0].mxu0
    %v166 = vadd.f32 %v98, %v165
    %v167 = vpop.f32.mrb[0].mxu0
    %168 = vdwg.mxu0
    %v169 = vmax.f32 %v166, 0.0
    %v170 = vlaneseq
    %v171 = vshrl.u32 %v170, 7
    %v172 = vsub.s32 0, %v171
    %v173 = vrot.slane %v94, %v172
    %174 = vmatprep.subr.mxu0 0.0
    %175 = vmatpush1.msra.mxu0 %v78
    %176 = vmatprep.subr.mxu0 0.0
    %177 = vmatpush1.msra.mxu0 %v79
    %178 = vmatprep.subr.mxu0 0.0
    %179 = vmatpush1.msra.mxu0 %v80
    %180 = vmatprep.subr.mxu0 0.0
    %181 = vmatpush1.msra.mxu0 %v81
    %182 = vmatprep.subr.mxu0 0.0
    %183 = vmatpush1.msra.mxu0 %v82
    %184 = vmatprep.subr.mxu0 0.0
    %185 = vmatpush1.msra.mxu0 %v83
    %186 = vmatprep.subr.mxu0 0.0
    %187 = vmatpush1.msra.mxu0 %v84
    %188 = vmatprep.subr.mxu0 0.0
    %189 = vmatpush1.msra.mxu0 %v85
    %190 = vmatprep.subr.mxu0 0.0
    %191 = vmatpush1.msra.mxu0 %v86
    %192 = vmatprep.subr.mxu0 0.0
    %193 = vmatpush1.msra.mxu0 %v87
    %194 = vmatprep.subr.mxu0 0.0
    %195 = vmatpush1.msra.mxu0 %v88
    %196 = vmatprep.subr.mxu0 0.0
    %197 = vmatpush1.msra.mxu0 %v89
    %198 = vmatprep.subr.mxu0 0.0
    %199 = vmatpush1.msra.mxu0 %v90
    %200 = vmatprep.subr.mxu0 0.0
    %201 = vmatpush1.msra.mxu0 %v91
    %202 = vmatprep.subr.mxu0 0.0
    %203 = vmatpush1.msra.mxu0 %v92
    %204 = vmatprep.subr.mxu0 0.0
    %205 = vmatpush1.msra.mxu0 %v93
    %206 = vmatprep.subr.mxu0 0.0
    %207 = vmatpush1.msra.mxu0 0.0
    %208 = vmatprep.subr.mxu0 0.0
    %209 = vmatpush1.msra.mxu0 0.0
    %210 = vmatprep.subr.mxu0 0.0
    %211 = vmatpush1.msra.mxu0 0.0
    %212 = vmatprep.subr.mxu0 0.0
    %213 = vmatpush1.msra.mxu0 0.0
    %214 = vmatprep.subr.mxu0 0.0
    %215 = vmatpush1.msra.mxu0 0.0
    %216 = vmatprep.subr.mxu0 0.0
    %217 = vmatpush1.msra.mxu0 0.0
    %218 = vmatprep.subr.mxu0 0.0
    %219 = vmatpush1.msra.mxu0 0.0
    %220 = vmatprep.subr.mxu0 0.0
    %221 = vmatpush1.msra.mxu0 0.0
    %222 = vmatprep.subr.mxu0 0.0
    %223 = vmatpush1.msra.mxu0 0.0
    %224 = vmatprep.subr.mxu0 0.0
    %225 = vmatpush1.msra.mxu0 0.0
    %226 = vmatprep.subr.mxu0 0.0
    %227 = vmatpush1.msra.mxu0 0.0
    %228 = vmatprep.subr.mxu0 0.0
    %229 = vmatpush1.msra.mxu0 0.0
    %230 = vmatprep.subr.mxu0 0.0
    %231 = vmatpush1.msra.mxu0 0.0
    %232 = vmatprep.subr.mxu0 0.0
    %233 = vmatpush1.msra.mxu0 0.0
    %234 = vmatprep.subr.mxu0 0.0
    %235 = vmatpush1.msra.mxu0 0.0
    %236 = vmatprep.subr.mxu0 0.0
    %237 = vmatpush1.msra.mxu0 0.0
    %238 = vmatprep.mubr.f32.mxu0 0.0
    %239 = vmatmul.mubr.f32.gmra.mrb[0].mxu0 %v169
    %v240 = vpop.f32.mrb[0].mxu0
    %v241 = vadd.f32 %v173, %v240
    %v242 = vpop.f32.mrb[0].mxu0
    %243 = vdwg.mxu0
    %v244 = vadd.f32 %v60, %v241
    %s245 = scalar_lea.vmem [#allocation5], 128
    %v246 = vld [vmem:[%s245] sm:$0xff]
    %v247 = vld [vmem:[%s245 + $0x8] sm:$0xff]
    %v248 = vld [vmem:[%s245 + $0x10] sm:$0xff]
    %v249 = vld [vmem:[%s245 + $0x18] sm:$0xff]
    %v250 = vld [vmem:[%s245 + $0x20] sm:$0xff]
    %v251 = vld [vmem:[%s245 + $0x28] sm:$0xff]
    %v252 = vld [vmem:[%s245 + $0x30] sm:$0xff]
    %v253 = vld [vmem:[%s245 + $0x38] sm:$0xff]
    %v254 = vld [vmem:[%s245 + $0x40] sm:$0xff]
    %v255 = vld [vmem:[%s245 + $0x48] sm:$0xff]
    %v256 = vld [vmem:[%s245 + $0x50] sm:$0xff]
    %v257 = vld [vmem:[%s245 + $0x58] sm:$0xff]
    %v258 = vld [vmem:[%s245 + $0x60] sm:$0xff]
    %v259 = vld [vmem:[%s245 + $0x68] sm:$0xff]
    %v260 = vld [vmem:[%s245 + $0x70] sm:$0xff]
    %v261 = vld [vmem:[%s245 + $0x78] sm:$0xff]
    %v262 = vld [vmem:[%s2 + $0x1] sm:$0x1]
    %s263 = scalar_lea.vmem [#allocation7], 128
    %v264 = vld [vmem:[%s263] sm:$0xff]
    %v265 = vld [vmem:[%s263 + $0x8] sm:$0xff]
    %v266 = vld [vmem:[%s263 + $0x10] sm:$0xff]
    %v267 = vld [vmem:[%s263 + $0x18] sm:$0xff]
    %v268 = vld [vmem:[%s263 + $0x20] sm:$0xff]
    %v269 = vld [vmem:[%s263 + $0x28] sm:$0xff]
    %v270 = vld [vmem:[%s263 + $0x30] sm:$0xff]
    %v271 = vld [vmem:[%s263 + $0x38] sm:$0xff]
    %v272 = vld [vmem:[%s263 + $0x40] sm:$0xff]
    %v273 = vld [vmem:[%s263 + $0x48] sm:$0xff]
    %v274 = vld [vmem:[%s263 + $0x50] sm:$0xff]
    %v275 = vld [vmem:[%s263 + $0x58] sm:$0xff]
    %v276 = vld [vmem:[%s263 + $0x60] sm:$0xff]
    %v277 = vld [vmem:[%s263 + $0x68] sm:$0xff]
    %v278 = vld [vmem:[%s263 + $0x70] sm:$0xff]
    %v279 = vld [vmem:[%s263 + $0x78] sm:$0xff]
    %v280 = vld [vmem:[%s4 + $0x1] sm:$0x1]
    %v281 = vlaneseq
    %v282 = vshrl.u32 %v281, 7
    %v283 = vsub.s32 0, %v282
    %v284 = vrot.slane %v262, %v283
    %285 = vmatprep.subr.mxu0 0.0
    %286 = vmatpush1.msra.mxu0 %v246
    %287 = vmatprep.subr.mxu0 0.0
    %288 = vmatpush1.msra.mxu0 %v247
    %289 = vmatprep.subr.mxu0 0.0
    %290 = vmatpush1.msra.mxu0 %v248
    %291 = vmatprep.subr.mxu0 0.0
    %292 = vmatpush1.msra.mxu0 %v249
    %293 = vmatprep.subr.mxu0 0.0
    %294 = vmatpush1.msra.mxu0 %v250
    %295 = vmatprep.subr.mxu0 0.0
    %296 = vmatpush1.msra.mxu0 %v251
    %297 = vmatprep.subr.mxu0 0.0
    %298 = vmatpush1.msra.mxu0 %v252
    %299 = vmatprep.subr.mxu0 0.0
    %300 = vmatpush1.msra.mxu0 %v253
    %301 = vmatprep.subr.mxu0 0.0
    %302 = vmatpush1.msra.mxu0 %v254
    %303 = vmatprep.subr.mxu0 0.0
    %304 = vmatpush1.msra.mxu0 %v255
    %305 = vmatprep.subr.mxu0 0.0
    %306 = vmatpush1.msra.mxu0 %v256
    %307 = vmatprep.subr.mxu0 0.0
    %308 = vmatpush1.msra.mxu0 %v257
    %309 = vmatprep.subr.mxu0 0.0
    %310 = vmatpush1.msra.mxu0 %v258
    %311 = vmatprep.subr.mxu0 0.0
    %312 = vmatpush1.msra.mxu0 %v259
    %313 = vmatprep.subr.mxu0 0.0
    %314 = vmatpush1.msra.mxu0 %v260
    %315 = vmatprep.subr.mxu0 0.0
    %316 = vmatpush1.msra.mxu0 %v261
    %317 = vmatprep.subr.mxu0 0.0
    %318 = vmatpush1.msra.mxu0 0.0
    %319 = vmatprep.subr.mxu0 0.0
    %320 = vmatpush1.msra.mxu0 0.0
    %321 = vmatprep.subr.mxu0 0.0
    %322 = vmatpush1.msra.mxu0 0.0
    %323 = vmatprep.subr.mxu0 0.0
    %324 = vmatpush1.msra.mxu0 0.0
    %325 = vmatprep.subr.mxu0 0.0
    %326 = vmatpush1.msra.mxu0 0.0
    %327 = vmatprep.subr.mxu0 0.0
    %328 = vmatpush1.msra.mxu0 0.0
    %329 = vmatprep.subr.mxu0 0.0
    %330 = vmatpush1.msra.mxu0 0.0
    %331 = vmatprep.subr.mxu0 0.0
    %332 = vmatpush1.msra.mxu0 0.0
    %333 = vmatprep.subr.mxu0 0.0
    %334 = vmatpush1.msra.mxu0 0.0
    %335 = vmatprep.subr.mxu0 0.0
    %336 = vmatpush1.msra.mxu0 0.0
    %337 = vmatprep.subr.mxu0 0.0
    %338 = vmatpush1.msra.mxu0 0.0
    %339 = vmatprep.subr.mxu0 0.0
    %340 = vmatpush1.msra.mxu0 0.0
    %341 = vmatprep.subr.mxu0 0.0
    %342 = vmatpush1.msra.mxu0 0.0
    %343 = vmatprep.subr.mxu0 0.0
    %344 = vmatpush1.msra.mxu0 0.0
    %345 = vmatprep.subr.mxu0 0.0
    %346 = vmatpush1.msra.mxu0 0.0
    %347 = vmatprep.subr.mxu0 0.0
    %348 = vmatpush1.msra.mxu0 0.0
    %349 = vmatprep.mubr.f32.mxu0 0.0
    %350 = vmatmul.mubr.f32.gmra.mrb[0].mxu0 %v244
    %v351 = vpop.f32.mrb[0].mxu0
    %v352 = vadd.f32 %v284, %v351
    %v353 = vpop.f32.mrb[0].mxu0
    %354 = vdwg.mxu0
    %v355 = vmax.f32 %v352, 0.0
    %v356 = vlaneseq
    %v357 = vshrl.u32 %v356, 7
    %v358 = vsub.s32 0, %v357
    %v359 = vrot.slane %v280, %v358
    %360 = vmatprep.subr.mxu0 0.0
    %361 = vmatpush1.msra.mxu0 %v264
    %362 = vmatprep.subr.mxu0 0.0
    %363 = vmatpush1.msra.mxu0 %v265
    %364 = vmatprep.subr.mxu0 0.0
    %365 = vmatpush1.msra.mxu0 %v266
    %366 = vmatprep.subr.mxu0 0.0
    %367 = vmatpush1.msra.mxu0 %v267
    %368 = vmatprep.subr.mxu0 0.0
    %369 = vmatpush1.msra.mxu0 %v268
    %370 = vmatprep.subr.mxu0 0.0
    %371 = vmatpush1.msra.mxu0 %v269
    %372 = vmatprep.subr.mxu0 0.0
    %373 = vmatpush1.msra.mxu0 %v270
    %374 = vmatprep.subr.mxu0 0.0
    %375 = vmatpush1.msra.mxu0 %v271
    %376 = vmatprep.subr.mxu0 0.0
    %377 = vmatpush1.msra.mxu0 %v272
    %378 = vmatprep.subr.mxu0 0.0
    %379 = vmatpush1.msra.mxu0 %v273
    %380 = vmatprep.subr.mxu0 0.0
    %381 = vmatpush1.msra.mxu0 %v274
    %382 = vmatprep.subr.mxu0 0.0
    %383 = vmatpush1.msra.mxu0 %v275
    %384 = vmatprep.subr.mxu0 0.0
    %385 = vmatpush1.msra.mxu0 %v276
    %386 = vmatprep.subr.mxu0 0.0
    %387 = vmatpush1.msra.mxu0 %v277
    %388 = vmatprep.subr.mxu0 0.0
    %389 = vmatpush1.msra.mxu0 %v278
    %390 = vmatprep.subr.mxu0 0.0
    %391 = vmatpush1.msra.mxu0 %v279
    %392 = vmatprep.subr.mxu0 0.0
    %393 = vmatpush1.msra.mxu0 0.0
    %394 = vmatprep.subr.mxu0 0.0
    %395 = vmatpush1.msra.mxu0 0.0
    %396 = vmatprep.subr.mxu0 0.0
    %397 = vmatpush1.msra.mxu0 0.0
    %398 = vmatprep.subr.mxu0 0.0
    %399 = vmatpush1.msra.mxu0 0.0
    %400 = vmatprep.subr.mxu0 0.0
    %401 = vmatpush1.msra.mxu0 0.0
    %402 = vmatprep.subr.mxu0 0.0
    %403 = vmatpush1.msra.mxu0 0.0
    %404 = vmatprep.subr.mxu0 0.0
    %405 = vmatpush1.msra.mxu0 0.0
    %406 = vmatprep.subr.mxu0 0.0
    %407 = vmatpush1.msra.mxu0 0.0
    %408 = vmatprep.subr.mxu0 0.0
    %409 = vmatpush1.msra.mxu0 0.0
    %410 = vmatprep.subr.mxu0 0.0
    %411 = vmatpush1.msra.mxu0 0.0
    %412 = vmatprep.subr.mxu0 0.0
    %413 = vmatpush1.msra.mxu0 0.0
    %414 = vmatprep.subr.mxu0 0.0
    %415 = vmatpush1.msra.mxu0 0.0
    %416 = vmatprep.subr.mxu0 0.0
    %417 = vmatpush1.msra.mxu0 0.0
    %418 = vmatprep.subr.mxu0 0.0
    %419 = vmatpush1.msra.mxu0 0.0
    %420 = vmatprep.subr.mxu0 0.0
    %421 = vmatpush1.msra.mxu0 0.0
    %422 = vmatprep.subr.mxu0 0.0
    %423 = vmatpush1.msra.mxu0 0.0
    %424 = vmatprep.mubr.f32.mxu0 0.0
    %425 = vmatmul.mubr.f32.gmra.mrb[0].mxu0 %v355
    %v426 = vpop.f32.mrb[0].mxu0
    %v427 = vadd.f32 %v359, %v426
    %v428 = vpop.f32.mrb[0].mxu0
    %429 = vdwg.mxu0
    %v430 = vadd.f32 %v244, %v427
    %s431 = scalar_lea.vmem [#allocation5], 256
    %v432 = vld [vmem:[%s431] sm:$0xff]
    %v433 = vld [vmem:[%s431 + $0x8] sm:$0xff]
    %v434 = vld [vmem:[%s431 + $0x10] sm:$0xff]
    %v435 = vld [vmem:[%s431 + $0x18] sm:$0xff]
    %v436 = vld [vmem:[%s431 + $0x20] sm:$0xff]
    %v437 = vld [vmem:[%s431 + $0x28] sm:$0xff]
    %v438 = vld [vmem:[%s431 + $0x30] sm:$0xff]
    %v439 = vld [vmem:[%s431 + $0x38] sm:$0xff]
    %v440 = vld [vmem:[%s431 + $0x40] sm:$0xff]
    %v441 = vld [vmem:[%s431 + $0x48] sm:$0xff]
    %v442 = vld [vmem:[%s431 + $0x50] sm:$0xff]
    %v443 = vld [vmem:[%s431 + $0x58] sm:$0xff]
    %v444 = vld [vmem:[%s431 + $0x60] sm:$0xff]
    %v445 = vld [vmem:[%s431 + $0x68] sm:$0xff]
    %v446 = vld [vmem:[%s431 + $0x70] sm:$0xff]
    %v447 = vld [vmem:[%s431 + $0x78] sm:$0xff]
    %v448 = vld [vmem:[%s2 + $0x2] sm:$0x1]
    %s449 = scalar_lea.vmem [#allocation7], 256
    %v450 = vld [vmem:[%s449] sm:$0xff]
    %v451 = vld [vmem:[%s449 + $0x8] sm:$0xff]
    %v452 = vld [vmem:[%s449 + $0x10] sm:$0xff]
    %v453 = vld [vmem:[%s449 + $0x18] sm:$0xff]
    %v454 = vld [vmem:[%s449 + $0x20] sm:$0xff]
    %v455 = vld [vmem:[%s449 + $0x28] sm:$0xff]
    %v456 = vld [vmem:[%s449 + $0x30] sm:$0xff]
    %v457 = vld [vmem:[%s449 + $0x38] sm:$0xff]
    %v458 = vld [vmem:[%s449 + $0x40] sm:$0xff]
    %v459 = vld [vmem:[%s449 + $0x48] sm:$0xff]
    %v460 = vld [vmem:[%s449 + $0x50] sm:$0xff]
    %v461 = vld [vmem:[%s449 + $0x58] sm:$0xff]
    %v462 = vld [vmem:[%s449 + $0x60] sm:$0xff]
    %v463 = vld [vmem:[%s449 + $0x68] sm:$0xff]
    %v464 = vld [vmem:[%s449 + $0x70] sm:$0xff]
    %v465 = vld [vmem:[%s449 + $0x78] sm:$0xff]
    %v466 = vld [vmem:[%s4 + $0x2] sm:$0x1]
    %v467 = vlaneseq
    %v468 = vshrl.u32 %v467, 7
    %v469 = vsub.s32 0, %v468
    %v470 = vrot.slane %v448, %v469
    %471 = vmatprep.subr.mxu0 0.0
    %472 = vmatpush1.msra.mxu0 %v432
    %473 = vmatprep.subr.mxu0 0.0
    %474 = vmatpush1.msra.mxu0 %v433
    %475 = vmatprep.subr.mxu0 0.0
    %476 = vmatpush1.msra.mxu0 %v434
    %477 = vmatprep.subr.mxu0 0.0
    %478 = vmatpush1.msra.mxu0 %v435
    %479 = vmatprep.subr.mxu0 0.0
    %480 = vmatpush1.msra.mxu0 %v436
    %481 = vmatprep.subr.mxu0 0.0
    %482 = vmatpush1.msra.mxu0 %v437
    %483 = vmatprep.subr.mxu0 0.0
    %484 = vmatpush1.msra.mxu0 %v438
    %485 = vmatprep.subr.mxu0 0.0
    %486 = vmatpush1.msra.mxu0 %v439
    %487 = vmatprep.subr.mxu0 0.0
    %488 = vmatpush1.msra.mxu0 %v440
    %489 = vmatprep.subr.mxu0 0.0
    %490 = vmatpush1.msra.mxu0 %v441
    %491 = vmatprep.subr.mxu0 0.0
    %492 = vmatpush1.msra.mxu0 %v442
    %493 = vmatprep.subr.mxu0 0.0
    %494 = vmatpush1.msra.mxu0 %v443
    %495 = vmatprep.subr.mxu0 0.0
    %496 = vmatpush1.msra.mxu0 %v444
    %497 = vmatprep.subr.mxu0 0.0
    %498 = vmatpush1.msra.mxu0 %v445
    %499 = vmatprep.subr.mxu0 0.0
    %500 = vmatpush1.msra.mxu0 %v446
    %501 = vmatprep.subr.mxu0 0.0
    %502 = vmatpush1.msra.mxu0 %v447
    %503 = vmatprep.subr.mxu0 0.0
    %504 = vmatpush1.msra.mxu0 0.0
    %505 = vmatprep.subr.mxu0 0.0
    %506 = vmatpush1.msra.mxu0 0.0
    %507 = vmatprep.subr.mxu0 0.0
    %508 = vmatpush1.msra.mxu0 0.0
    %509 = vmatprep.subr.mxu0 0.0
    %510 = vmatpush1.msra.mxu0 0.0
    %511 = vmatprep.subr.mxu0 0.0
    %512 = vmatpush1.msra.mxu0 0.0
    %513 = vmatprep.subr.mxu0 0.0
    %514 = vmatpush1.msra.mxu0 0.0
    %515 = vmatprep.subr.mxu0 0.0
    %516 = vmatpush1.msra.mxu0 0.0
    %517 = vmatprep.subr.mxu0 0.0
    %518 = vmatpush1.msra.mxu0 0.0
    %519 = vmatprep.subr.mxu0 0.0
    %520 = vmatpush1.msra.mxu0 0.0
    %521 = vmatprep.subr.mxu0 0.0
    %522 = vmatpush1.msra.mxu0 0.0
    %523 = vmatprep.subr.mxu0 0.0
    %524 = vmatpush1.msra.mxu0 0.0
    %525 = vmatprep.subr.mxu0 0.0
    %526 = vmatpush1.msra.mxu0 0.0
    %527 = vmatprep.subr.mxu0 0.0
    %528 = vmatpush1.msra.mxu0 0.0
    %529 = vmatprep.subr.mxu0 0.0
    %530 = vmatpush1.msra.mxu0 0.0
    %531 = vmatprep.subr.mxu0 0.0
    %532 = vmatpush1.msra.mxu0 0.0
    %533 = vmatprep.subr.mxu0 0.0
    %534 = vmatpush1.msra.mxu0 0.0
    %535 = vmatprep.mubr.f32.mxu0 0.0
    %536 = vmatmul.mubr.f32.gmra.mrb[0].mxu0 %v430
    %v537 = vpop.f32.mrb[0].mxu0
    %v538 = vadd.f32 %v470, %v537
    %v539 = vpop.f32.mrb[0].mxu0
    %540 = vdwg.mxu0
    %v541 = vmax.f32 %v538, 0.0
    %v542 = vlaneseq
    %v543 = vshrl.u32 %v542, 7
    %v544 = vsub.s32 0, %v543
    %v545 = vrot.slane %v466, %v544
    %546 = vmatprep.subr.mxu0 0.0
    %547 = vmatpush1.msra.mxu0 %v450
    %548 = vmatprep.subr.mxu0 0.0
    %549 = vmatpush1.msra.mxu0 %v451
    %550 = vmatprep.subr.mxu0 0.0
    %551 = vmatpush1.msra.mxu0 %v452
    %552 = vmatprep.subr.mxu0 0.0
    %553 = vmatpush1.msra.mxu0 %v453
    %554 = vmatprep.subr.mxu0 0.0
    %555 = vmatpush1.msra.mxu0 %v454
    %556 = vmatprep.subr.mxu0 0.0
    %557 = vmatpush1.msra.mxu0 %v455
    %558 = vmatprep.subr.mxu0 0.0
    %559 = vmatpush1.msra.mxu0 %v456
    %560 = vmatprep.subr.mxu0 0.0
    %561 = vmatpush1.msra.mxu0 %v457
    %562 = vmatprep.subr.mxu0 0.0
    %563 = vmatpush1.msra.mxu0 %v458
    %564 = vmatprep.subr.mxu0 0.0
    %565 = vmatpush1.msra.mxu0 %v459
    %566 = vmatprep.subr.mxu0 0.0
    %567 = vmatpush1.msra.mxu0 %v460
    %568 = vmatprep.subr.mxu0 0.0
    %569 = vmatpush1.msra.mxu0 %v461
    %570 = vmatprep.subr.mxu0 0.0
    %571 = vmatpush1.msra.mxu0 %v462
    %572 = vmatprep.subr.mxu0 0.0
    %573 = vmatpush1.msra.mxu0 %v463
    %574 = vmatprep.subr.mxu0 0.0
    %575 = vmatpush1.msra.mxu0 %v464
    %576 = vmatprep.subr.mxu0 0.0
    %577 = vmatpush1.msra.mxu0 %v465
    %578 = vmatprep.subr.mxu0 0.0
    %579 = vmatpush1.msra.mxu0 0.0
    %580 = vmatprep.subr.mxu0 0.0
    %581 = vmatpush1.msra.mxu0 0.0
    %582 = vmatprep.subr.mxu0 0.0
    %583 = vmatpush1.msra.mxu0 0.0
    %584 = vmatprep.subr.mxu0 0.0
    %585 = vmatpush1.msra.mxu0 0.0
    %586 = vmatprep.subr.mxu0 0.0
    %587 = vmatpush1.msra.mxu0 0.0
    %588 = vmatprep.subr.mxu0 0.0
    %589 = vmatpush1.msra.mxu0 0.0
    %590 = vmatprep.subr.mxu0 0.0
    %591 = vmatpush1.msra.mxu0 0.0
    %592 = vmatprep.subr.mxu0 0.0
    %593 = vmatpush1.msra.mxu0 0.0
    %594 = vmatprep.subr.mxu0 0.0
    %595 = vmatpush1.msra.mxu0 0.0
    %596 = vmatprep.subr.mxu0 0.0
    %597 = vmatpush1.msra.mxu0 0.0
    %598 = vmatprep.subr.mxu0 0.0
    %599 = vmatpush1.msra.mxu0 0.0
    %600 = vmatprep.subr.mxu0 0.0
    %601 = vmatpush1.msra.mxu0 0.0
    %602 = vmatprep.subr.mxu0 0.0
    %603 = vmatpush1.msra.mxu0 0.0
    %604 = vmatprep.subr.mxu0 0.0
    %605 = vmatpush1.msra.mxu0 0.0
    %606 = vmatprep.subr.mxu0 0.0
    %607 = vmatpush1.msra.mxu0 0.0
    %608 = vmatprep.subr.mxu0 0.0
    %609 = vmatpush1.msra.mxu0 0.0
    %610 = vmatprep.mubr.f32.mxu0 0.0
    %611 = vmatmul.mubr.f32.gmra.mrb[0].mxu0 %v541
    %v612 = vpop.f32.mrb[0].mxu0
    %v613 = vadd.f32 %v545, %v612
    %v614 = vpop.f32.mrb[0].mxu0
    %615 = vdwg.mxu0
    %v616 = vadd.f32 %v430, %v613
    %617 = vst [vmem:[#allocation8] sm:$0xff] %v616
    // Predicated region
    $region34: #{tpu_custom_call.1} parent=1 // pred_check
      _
    $region35: #{tpu_custom_call.1} parent=1 // pred_check_branch
      %619 = sbr.rel (0) target = $region37
    $region36: #{tpu_custom_call.1} parent=1 // pred_region
      %s621 = ssub.s32 128, 128
      %622 = vsyncadd [#allocation4], %s621
      %s624 = sshll.u32 [#allocation8], 4
      %s625 = int_to_ptr.vmem [resolvable:$true] %s624
      %627 = dma.vmem_to_hbm [thread:$0]  %s625, 128, %s5, [#allocation4]
    $region37: #{tpu_custom_call.1} parent=1 // pred_fallthru
      _
    // Predicated region
    $region38: #{tpu_custom_call.1} parent=1 // pred_check
      _
    $region39: #{tpu_custom_call.1} parent=1 // pred_check_branch
      %629 = sbr.rel (0) target = $region41
    $region40: #{tpu_custom_call.1} parent=1 // pred_region
      %630 = dma.done [#allocation4], 128
    $region41: #{tpu_custom_call.1} parent=1 // pred_fallthru
      _
    %631 = vsyncpa [#allocation3], 1
    %632 = vsyncpa [#allocation6], 1
    %633 = vsyncpa [#allocation4], 1

</llo_original>
